<compile_context>
chip_gen: v5e
topology: v5e:2x2
jax: 0.10.0
libtpu: 0.0.40
codegen_flags: <defaults>
</compile_context>

<pallas_src>
import jax
import jax.numpy as jnp
from jax.experimental import pallas as pl
from jax.experimental.pallas import tpu as pltpu

# TODO(synk): the sklearn TfidfVectorizer (char n-gram text featurization)
# has no Pallas/tensor equivalent; the kernel consumes precomputed dense
# TF-IDF vectors instead.

V_FEATS = 512   # synthetic stand-in for len(tfidf.get_feature_names())
H1 = 256
H2 = 100        # true output width of the module
H2_PAD = 128    # lane-dense padded width inside the kernel (cols 100..127 zero)

MAX_TILE_B = 512
MAX_TILE_V = 2048


def _round_up(x, m):
    return ((x + m - 1) // m) * m


def mlp_kernel(x_ref, w1_ref, b1_ref, w2_ref, b2_ref, o_ref, h_acc):
    # x_ref:  (TB, TV)   bf16    w1_ref: (TV, 256)  bf16   b1_ref: (1, 256) f32
    # w2_ref: (256, 128) bf16    b2_ref: (1, 128)   f32    o_ref:  (TB, 128) f32
    # h_acc:  (TB, 256)  f32 scratch accumulator for the first matmul.
    k = pl.program_id(1)

    @pl.when(k == 0)
    def _():
        h_acc[...] = jnp.zeros_like(h_acc)

    h_acc[...] += jnp.dot(x_ref[...], w1_ref[...],
                          preferred_element_type=jnp.float32)

    @pl.when(k == pl.num_programs(1) - 1)
    def _():
        h = jnp.maximum(h_acc[...] + b1_ref[...], 0.0)
        # Dropout(p=0.1): eval-mode => identity (no scaling, no masking).
        o = jnp.dot(h.astype(jnp.bfloat16), w2_ref[...],
                    preferred_element_type=jnp.float32)
        o_ref[...] = jnp.maximum(o + b2_ref[...], 0.0)


def tfidf_dense_forward(x, w1, b1, w2, b2, *, tile_b=None, tile_v=None):
    """x: (B, V) dense tf-idf vectors. w1:(V,256), b1:(1,256), w2:(256,128),
    b2:(1,128) (zero-padded beyond col 100). Returns (B, 100) float32."""
    B, V = x.shape
    assert w1.shape == (V, H1)
    assert w2.shape == (H1, H2_PAD)

    # --- batch tiling -------------------------------------------------------
    if tile_b is None:
        if B <= 16:
            tile_b = _round_up(max(B, 1), 8)
        else:
            # Big tiles amortize the ~0.35us/step pipeline overhead and keep
            # the MXU fed with many rows; cap at 512 and keep grid >= 2 so the
            # "parallel" axis can shard across TensorCores.
            tile_b = min(MAX_TILE_B, _round_up(pl.cdiv(B, 2), 8))
    Bp = _round_up(B, tile_b)

    # --- vocab / K tiling ---------------------------------------------------
    Vp = _round_up(V, 128)
    if tile_v is None:
        tile_v = min(MAX_TILE_V, Vp)
    Vp = _round_up(Vp, tile_v)

    if (Bp, Vp) != (B, V):
        x = jnp.pad(x, ((0, Bp - B), (0, Vp - V)))
    if Vp != V:
        w1 = jnp.pad(w1, ((0, Vp - V), (0, 0)))

    # bf16 MXU inputs, f32 accumulation; biases stay f32.
    x = x.astype(jnp.bfloat16)
    w1 = w1.astype(jnp.bfloat16)
    w2 = w2.astype(jnp.bfloat16)
    b1 = b1.astype(jnp.float32)
    b2 = b2.astype(jnp.float32)

    grid = (Bp // tile_b, Vp // tile_v)

    flops = 2 * Bp * (Vp * H1 + H1 * H2_PAD)
    bytes_accessed = (x.size * 2 + grid[0] * w1.size * 2 + w2.size * 2
                      + b1.size * 4 + b2.size * 4 + Bp * H2_PAD * 4)

    out = pl.pallas_call(
        mlp_kernel,
        out_shape=jax.ShapeDtypeStruct((Bp, H2_PAD), jnp.float32),
        grid_spec=pltpu.PrefetchScalarGridSpec(
            num_scalar_prefetch=0,
            grid=grid,
            in_specs=[
                pl.BlockSpec((tile_b, tile_v), lambda i, k: (i, k)),  # x tile
                pl.BlockSpec((tile_v, H1),     lambda i, k: (k, 0)),  # W1 tile
                pl.BlockSpec((1, H1),          lambda i, k: (0, 0)),  # b1
                pl.BlockSpec((H1, H2_PAD),     lambda i, k: (0, 0)),  # W2
                pl.BlockSpec((1, H2_PAD),      lambda i, k: (0, 0)),  # b2
            ],
            out_specs=pl.BlockSpec((tile_b, H2_PAD), lambda i, k: (i, 0)),
            scratch_shapes=[pltpu.VMEM((tile_b, H1), jnp.float32)],
        ),
        compiler_params=pltpu.CompilerParams(
            dimension_semantics=("parallel", "arbitrary")),
        cost_estimate=pl.CostEstimate(
            flops=flops, transcendentals=0, bytes_accessed=bytes_accessed),
    )(x, w1, b1, w2, b2)

    return out[:B, :H2]


def init_params(key):
    """Deterministic parameter init matching nn.Linear shapes, transposed to
    [in, out] kernel layout, with the second layer zero-padded to 128 lanes."""
    k1, k2, k3, k4 = jax.random.split(key, 4)
    # PyTorch nn.Linear(V, 256): weight (256, V), bias (256,)
    w1_pt = jax.random.uniform(k1, (H1, V_FEATS), jnp.float32,
                               -1.0 / jnp.sqrt(V_FEATS), 1.0 / jnp.sqrt(V_FEATS))
    b1_pt = jax.random.uniform(k2, (H1,), jnp.float32,
                               -1.0 / jnp.sqrt(V_FEATS), 1.0 / jnp.sqrt(V_FEATS))
    # PyTorch nn.Linear(256, 100): weight (100, 256), bias (100,)
    w2_pt = jax.random.uniform(k3, (H2, H1), jnp.float32,
                               -1.0 / jnp.sqrt(H1), 1.0 / jnp.sqrt(H1))
    b2_pt = jax.random.uniform(k4, (H2,), jnp.float32,
                               -1.0 / jnp.sqrt(H1), 1.0 / jnp.sqrt(H1))
    # Kernel layout: W stored [in, out]; pad second layer to 128 output lanes.
    w1 = w1_pt.T                                   # (V, 256)
    b1 = b1_pt.reshape(1, H1)                      # (1, 256)
    w2 = jnp.zeros((H1, H2_PAD), jnp.float32).at[:, :H2].set(w2_pt.T)
    b2 = jnp.zeros((1, H2_PAD), jnp.float32).at[:, :H2].set(b2_pt.reshape(1, H2))
    return w1, b1, w2, b2


def reference_forward(x, w1, b1, w2, b2):
    """Pure-JAX reference replicating the kernel's numerics (bf16 inputs to
    both matmuls, f32 accumulation)."""
    xb = x.astype(jnp.bfloat16)
    h = jnp.dot(xb, w1.astype(jnp.bfloat16), preferred_element_type=jnp.float32)
    h = jnp.maximum(h + b1, 0.0)
    o = jnp.dot(h.astype(jnp.bfloat16), w2.astype(jnp.bfloat16),
                preferred_element_type=jnp.float32)
    o = jnp.maximum(o + b2, 0.0)
    return o[:, :H2]


if __name__ == "__main__":
    key = jax.random.PRNGKey(0)
    kx, kp = jax.random.split(key)

    B = 64
    # Synthetic "dense tf-idf" vectors: sparse-ish non-negative values.
    x = jax.random.uniform(kx, (B, V_FEATS), jnp.float32)
    x = jnp.where(x > 0.9, x, 0.0)   # mostly zeros, like tf-idf output

    w1, b1, w2, b2 = init_params(kp)

    out = tfidf_dense_forward(x, w1, b1, w2, b2)
    out = jax.block_until_ready(out)

    ref = reference_forward(x, w1, b1, w2, b2)
    assert out.shape == (B, H2)
    assert jnp.allclose(out, ref, atol=1e-2, rtol=1e-2), (
        float(jnp.max(jnp.abs(out - ref))))

    print("KERNEL_OK")
</pallas_src>

<mosaic_0001>
module attributes {stable_mosaic.version = 11 : i64} {
  func.func @mlp_kernel(%arg0: i32, %arg1: i32, %arg2: memref<32x512xbf16, #tpu.memory_space<vmem>>, %arg3: memref<512x256xbf16, #tpu.memory_space<vmem>>, %arg4: memref<1x256xf32, #tpu.memory_space<vmem>>, %arg5: memref<256x128xbf16, #tpu.memory_space<vmem>>, %arg6: memref<1x128xf32, #tpu.memory_space<vmem>>, %arg7: memref<32x128xf32, #tpu.memory_space<vmem>>, %arg8: memref<32x256xf32, #tpu.memory_space<vmem>>) attributes {dimension_semantics = [#tpu.dimension_semantics<parallel>, #tpu.dimension_semantics<arbitrary>], iteration_bounds = array<i64: 2, 1>, scalar_prefetch = 0 : i64, scratch_operands = 1 : i64, tpu.core_type = #tpu.core_type<tc>, window_params = [{transform_indices = @transform_0, window_bounds = array<i64: 32, 512>}, {transform_indices = @transform_1, window_bounds = array<i64: 512, 256>}, {pipeline_mode = #tpu.pipeline_mode<synchronous>, transform_indices = @transform_2, window_bounds = array<i64: 1, 256>}, {pipeline_mode = #tpu.pipeline_mode<synchronous>, transform_indices = @transform_3, window_bounds = array<i64: 256, 128>}, {pipeline_mode = #tpu.pipeline_mode<synchronous>, transform_indices = @transform_4, window_bounds = array<i64: 1, 128>}, {transform_indices = @transform_5, window_bounds = array<i64: 32, 128>}]} {
    %c0_i32 = arith.constant 0 : i32
    %0 = arith.cmpi eq, %arg1, %c0_i32 : i32
    %1 = arith.extui %0 : i1 to i32
    %c0_i32_0 = arith.constant 0 : i32
    %2 = arith.cmpi ne, %1, %c0_i32_0 : i32
    scf.if %2 {
      %cst_10 = arith.constant 0.000000e+00 : f32
      %12 = vector.broadcast %cst_10 : f32 to vector<32x256xf32>
      %c0_11 = arith.constant 0 : index
      %c0_12 = arith.constant 0 : index
      %13 = vector.load %arg8[%c0_11, %c0_12] : memref<32x256xf32, #tpu.memory_space<vmem>>, vector<32x256xf32>
      tpu.vector_store %arg8[%c0_11, %c0_12], %12 {strides = array<i32>} : memref<32x256xf32, #tpu.memory_space<vmem>>, vector<32x256xf32>,
    } else {
    }
    %c0 = arith.constant 0 : index
    %c0_1 = arith.constant 0 : index
    %3 = vector.load %arg8[%c0, %c0_1] : memref<32x256xf32, #tpu.memory_space<vmem>>, vector<32x256xf32>
    %c0_2 = arith.constant 0 : index
    %c0_3 = arith.constant 0 : index
    %4 = vector.load %arg2[%c0_2, %c0_3] : memref<32x512xbf16, #tpu.memory_space<vmem>>, vector<32x512xbf16>
    %c0_4 = arith.constant 0 : index
    %c0_5 = arith.constant 0 : index
    %5 = vector.load %arg3[%c0_4, %c0_5] : memref<512x256xbf16, #tpu.memory_space<vmem>>, vector<512x256xbf16>
    %cst = arith.constant dense<0.000000e+00> : vector<32x256xf32>
    %6 = tpu.matmul %4, %5, %cst {dimension_numbers = #tpu.dot_dimension_numbers<[1], [0], [0], [1], [0, 0, 1, 1], [], []>} : vector<32x512xbf16>, vector<512x256xbf16>, vector<32x256xf32> -> vector<32x256xf32>
    %7 = arith.addf %3, %6 : vector<32x256xf32>
    %c0_6 = arith.constant 0 : index
    %c0_7 = arith.constant 0 : index
    %8 = vector.load %arg8[%c0_6, %c0_7] : memref<32x256xf32, #tpu.memory_space<vmem>>, vector<32x256xf32>
    tpu.vector_store %arg8[%c0_6, %c0_7], %7 {strides = array<i32>} : memref<32x256xf32, #tpu.memory_space<vmem>>, vector<32x256xf32>,
    %c0_i32_8 = arith.constant 0 : i32
    %9 = arith.cmpi eq, %arg1, %c0_i32_8 : i32
    %10 = arith.extui %9 : i1 to i32
    %c0_i32_9 = arith.constant 0 : i32
    %11 = arith.cmpi ne, %10, %c0_i32_9 : i32
    scf.if %11 {
      %c0_10 = arith.constant 0 : index
      %c0_11 = arith.constant 0 : index
      %12 = vector.load %arg8[%c0_10, %c0_11] : memref<32x256xf32, #tpu.memory_space<vmem>>, vector<32x256xf32>
      %c0_12 = arith.constant 0 : index
      %c0_13 = arith.constant 0 : index
      %13 = vector.load %arg4[%c0_12, %c0_13] : memref<1x256xf32, #tpu.memory_space<vmem>>, vector<1x256xf32>
      %14 = vector.broadcast %13 : vector<1x256xf32> to vector<32x256xf32>
      %15 = arith.addf %12, %14 : vector<32x256xf32>
      %cst_14 = arith.constant 0.000000e+00 : f32
      %16 = vector.broadcast %cst_14 : f32 to vector<32x256xf32>
      %17 = arith.maximumf %15, %16 : vector<32x256xf32>
      %18 = arith.truncf %17 : vector<32x256xf32> to vector<32x256xbf16>
      %c0_15 = arith.constant 0 : index
      %c0_16 = arith.constant 0 : index
      %19 = vector.load %arg5[%c0_15, %c0_16] : memref<256x128xbf16, #tpu.memory_space<vmem>>, vector<256x128xbf16>
      %cst_17 = arith.constant dense<0.000000e+00> : vector<32x128xf32>
      %20 = tpu.matmul %18, %19, %cst_17 {dimension_numbers = #tpu.dot_dimension_numbers<[1], [0], [0], [1], [0, 0, 1, 1], [], []>} : vector<32x256xbf16>, vector<256x128xbf16>, vector<32x128xf32> -> vector<32x128xf32>
      %c0_18 = arith.constant 0 : index
      %c0_19 = arith.constant 0 : index
      %21 = vector.load %arg6[%c0_18, %c0_19] : memref<1x128xf32, #tpu.memory_space<vmem>>, vector<1x128xf32>
      %22 = vector.broadcast %21 : vector<1x128xf32> to vector<32x128xf32>
      %23 = arith.addf %20, %22 : vector<32x128xf32>
      %cst_20 = arith.constant 0.000000e+00 : f32
      %24 = vector.broadcast %cst_20 : f32 to vector<32x128xf32>
      %25 = arith.maximumf %23, %24 : vector<32x128xf32>
      %c0_21 = arith.constant 0 : index
      %c0_22 = arith.constant 0 : index
      %26 = vector.load %arg7[%c0_21, %c0_22] : memref<32x128xf32, #tpu.memory_space<vmem>>, vector<32x128xf32>
      tpu.vector_store %arg7[%c0_21, %c0_22], %25 {strides = array<i32>} : memref<32x128xf32, #tpu.memory_space<vmem>>, vector<32x128xf32>,
    } else {
    }
    return
  }
  func.func @transform_0(%arg0: i32, %arg1: i32) -> (i32, i32) {
    %c0_i32 = arith.constant 0 : i32
    return %arg0, %arg1 : i32, i32
  }
  func.func @transform_1(%arg0: i32, %arg1: i32) -> (i32, i32) {
    %c0_i32 = arith.constant 0 : i32
    %c0_i32_0 = arith.constant 0 : i32
    return %arg1, %c0_i32 : i32, i32
  }
  func.func @transform_2(%arg0: i32, %arg1: i32) -> (i32, i32) {
    %c0_i32 = arith.constant 0 : i32
    %c0_i32_0 = arith.constant 0 : i32
    %c0_i32_1 = arith.constant 0 : i32
    return %c0_i32, %c0_i32_0 : i32, i32
  }
  func.func @transform_3(%arg0: i32, %arg1: i32) -> (i32, i32) {
    %c0_i32 = arith.constant 0 : i32
    %c0_i32_0 = arith.constant 0 : i32
    %c0_i32_1 = arith.constant 0 : i32
    return %c0_i32, %c0_i32_0 : i32, i32
  }
  func.func @transform_4(%arg0: i32, %arg1: i32) -> (i32, i32) {
    %c0_i32 = arith.constant 0 : i32
    %c0_i32_0 = arith.constant 0 : i32
    %c0_i32_1 = arith.constant 0 : i32
    return %c0_i32, %c0_i32_0 : i32, i32
  }
  func.func @transform_5(%arg0: i32, %arg1: i32) -> (i32, i32) {
    %c0_i32 = arith.constant 0 : i32
    %c0_i32_0 = arith.constant 0 : i32
    return %arg0, %c0_i32 : i32, i32
  }
}

</mosaic_0001>

<llo_original>
// kernel: tpu_custom_call.1
$region0: #{tpu_custom_call.1}
  #allocation0 [shape = 'u32[]', space=smem, size = 0x4, offset = 0x4, fixed_abs, tag = 'smem constant byte address 0x4 - core index']
  #allocation1 [shape = 'u32[72,128]{1,0:T(1,128)}', space=vmem, size = 0x9000, scoped, tag = 'internal scratch']
  #allocation2 [shape = 'f32[32,256]{1,0:T(8,128)}', space=vmem, size = 0x8000, scoped, tag = 'scratch operand']
  %s0 = inlined_call_operand.hbm [shape: bf16[64,512], index: 0, kind: input, shape index: {}]
  %s1 = inlined_call_operand.hbm [shape: bf16[512,256], index: 1, kind: input, shape index: {}]
  %s2 = inlined_call_operand.hbm [shape: f32[1,256], index: 2, kind: input, shape index: {}]
  %s3 = inlined_call_operand.hbm [shape: bf16[256,128], index: 3, kind: input, shape index: {}]
  %s4 = inlined_call_operand.vmem [shape: f32[1,128], index: 4, kind: input, shape index: {}]
  %s5 = inlined_call_operand.hbm [shape: f32[64,128], index: 5, kind: output, shape index: {}]
  %s6 = sld [smem:[#allocation0]]
  $region77: #{tpu_custom_call.1} parent=0
    _
  %s8 = ssub.s32 1, %s6
  %s9 = scalar_select 0, %s8, %s6
  $region1: #{tpu_custom_call.1} parent=0
    #allocation3 [shape = 'u8[65536]{0}', space=vmem, size = 0x10000, scoped, tag = 'input window, operand 0']
    #allocation4 [shape = 's32[2]{0}', space=sflag, size = 0x8, scoped, tag = 'scoped memory for tpu_custom_call.1']
    #allocation5 [shape = 's32[2]{0}', space=sflag, size = 0x8, scoped, tag = 'scoped memory for tpu_custom_call.1']
    #allocation6 [shape = 'u8[262144]{0}', space=vmem, size = 0x40000, scoped, tag = 'input window, operand 1, single buffered']
    #allocation7 [shape = 's32[1]{0}', space=sflag, size = 0x4, scoped, tag = 'scoped memory for tpu_custom_call.1']
    #allocation8 [shape = 'u8[1024]{0}', space=vmem, size = 0x400, scoped, tag = 'input window, operand 2, single buffered']
    #allocation9 [shape = 'u8[65536]{0}', space=vmem, size = 0x10000, scoped, tag = 'input window, operand 3, single buffered']
    #allocation10 [shape = 's32[1]{0}', space=sflag, size = 0x4, scoped, tag = 'scoped memory for tpu_custom_call.1']
    #allocation11 [shape = 'u8[32768]{0}', space=vmem, size = 0x8000, scoped, tag = 'output window, operand 0']
    %10 = vsyncpa [#allocation4], 0
    %s11 = scalar_lea.sflag [#allocation4], 1
    %12 = vsyncpa %s11, 0
    %13 = vsyncpa [#allocation7], 0
    %14 = vsyncpa [#allocation10], 0
    %15 = vsyncpa [#allocation5], 0
    %s16 = scalar_lea.sflag [#allocation5], 1
    %17 = vsyncpa %s16, 0
    loop: start=0, step=1, limit=4
    $region2: #{tpu_custom_call.1} parent=1 // loop_pre_header
      _
    $region3: #{tpu_custom_call.1} parent=1 // loop_header
      %s19 = sphi 0, %s23
      %p20 = scmp.ge.s32.totalorder %s19, 4
      %s26 = sphi 0, %s38
      %s27 = sphi 0, %s34
      %s28 = sphi 0, %s26
      %s29 = sphi 0, %s27
      %s30 = sphi 0, %s28
      %s31 = sphi 0, %s29
      %s43 = sphi 0, %s45
      %s46 = sphi 0, %s43
      %s47 = sphi 0, %s46
      %s63 = sphi 0, %s47
      %s69 = sphi 0, %s71
      %s72 = sphi 0, %s69
      %s73 = sphi 0, %s72
      %s89 = sphi 0, %s73
      %s93 = sphi 0, %s93
      %s95 = sphi 0, %s93
      %s96 = sphi 0, %s95
      %s110 = sphi 0, %s96
      %s114 = sphi 0, %s114
      %s116 = sphi 0, %s114
      %s117 = sphi 0, %s116
      %s131 = sphi 0, %s117
      %s135 = sphi 0, %s135
      %s137 = sphi 0, %s135
      %s138 = sphi 0, %s137
      %s152 = sphi 0, %s138
      %s158 = sphi 0, %s160
      %s161 = sphi 0, %s158
      %s162 = sphi 0, %s161
      %s178 = sphi 0, %s162
    $region4: #{tpu_custom_call.1} parent=1 // loop_header_branch
      %22 = sbr.rel (%p20) target = $region8
    $region5: #{tpu_custom_call.1} parent=1 // loop_body
      %s24 = ssub.s32 %s19, 1
      %s25 = ssub.s32 %s19, 2
      %s32 = sadd.s32 1, %s27
      %p33 = scmp.ge.s32.totalorder %s32, 1
      %s34 = scalar_select %p33, 0, %s32
      %s35 = sadd.s32 1, %s26
      %s36 = scalar_select %p33, %s35, %s26
      %p37 = scmp.ge.s32.totalorder %s36, 2
      %s38 = scalar_select %p37, 0, %s36
      %s39 = ssub.s32 %s26, %s38
      %s40 = ssub.s32 %s27, %s34
      %s41 = sor.u32 %s39, %s40
      %p42 = scmp.eq.s32.totalorder %s41, 0
      %s44 = sadd.s32 %s43, 1
      %s45 = scalar_select %p42, %s43, %s44
      %p48 = pneg %p42
      %p49 = scmp.eq.s32.totalorder %s19, 1
      %p50 = por %p48, %p49
      %p51 = scmp.ne.s32.totalorder %s43, %s46
      %p52 = scmp.eq.s32.totalorder %s19, 0
      %p53 = por %p51, %p52
      %p54 = scmp.ne.s32.totalorder %s43, %s46
      %p55 = scmp.eq.s32.totalorder %s24, 1
      %p56 = por %p54, %p55
      %p57 = scmp.ne.s32.totalorder %s46, %s47
      %p58 = scmp.eq.s32.totalorder %s24, 0
      %p59 = por %p57, %p58
      %p60 = scmp.ne.s32.totalorder %s46, %s47
      %p61 = scmp.eq.s32.totalorder %s25, 1
      %p62 = por %p60, %p61
      %p64 = scmp.ne.s32.totalorder %s47, %s63
      %p65 = scmp.eq.s32.totalorder %s25, 0
      %p66 = por %p64, %p65
      %s67 = ssub.s32 %s27, %s34
      %p68 = scmp.eq.s32.totalorder %s67, 0
      %s70 = sadd.s32 %s69, 1
      %s71 = scalar_select %p68, %s69, %s70
      %p74 = pneg %p68
      %p75 = scmp.eq.s32.totalorder %s19, 1
      %p76 = por %p74, %p75
      %p77 = scmp.ne.s32.totalorder %s69, %s72
      %p78 = scmp.eq.s32.totalorder %s19, 0
      %p79 = por %p77, %p78
      %p80 = scmp.ne.s32.totalorder %s69, %s72
      %p81 = scmp.eq.s32.totalorder %s24, 1
      %p82 = por %p80, %p81
      %p83 = scmp.ne.s32.totalorder %s72, %s73
      %p84 = scmp.eq.s32.totalorder %s24, 0
      %p85 = por %p83, %p84
      %p86 = scmp.ne.s32.totalorder %s72, %s73
      %p87 = scmp.eq.s32.totalorder %s25, 1
      %p88 = por %p86, %p87
      %p90 = scmp.ne.s32.totalorder %s73, %s89
      %p91 = scmp.eq.s32.totalorder %s25, 0
      %p92 = por %p90, %p91
      %s94 = sadd.s32 %s93, 1
      %p97 = scmp.eq.s32.totalorder %s19, 1
      %p98 = scmp.ne.s32.totalorder %s93, %s95
      %p99 = scmp.eq.s32.totalorder %s19, 0
      %p100 = por %p98, %p99
      %p101 = scmp.ne.s32.totalorder %s93, %s95
      %p102 = scmp.eq.s32.totalorder %s24, 1
      %p103 = por %p101, %p102
      %p104 = scmp.ne.s32.totalorder %s95, %s96
      %p105 = scmp.eq.s32.totalorder %s24, 0
      %p106 = por %p104, %p105
      %p107 = scmp.ne.s32.totalorder %s95, %s96
      %p108 = scmp.eq.s32.totalorder %s25, 1
      %p109 = por %p107, %p108
      %p111 = scmp.ne.s32.totalorder %s96, %s110
      %p112 = scmp.eq.s32.totalorder %s25, 0
      %p113 = por %p111, %p112
      %s115 = sadd.s32 %s114, 1
      %p118 = scmp.eq.s32.totalorder %s19, 1
      %p119 = scmp.ne.s32.totalorder %s114, %s116
      %p120 = scmp.eq.s32.totalorder %s19, 0
      %p121 = por %p119, %p120
      %p122 = scmp.ne.s32.totalorder %s114, %s116
      %p123 = scmp.eq.s32.totalorder %s24, 1
      %p124 = por %p122, %p123
      %p125 = scmp.ne.s32.totalorder %s116, %s117
      %p126 = scmp.eq.s32.totalorder %s24, 0
      %p127 = por %p125, %p126
      %p128 = scmp.ne.s32.totalorder %s116, %s117
      %p129 = scmp.eq.s32.totalorder %s25, 1
      %p130 = por %p128, %p129
      %p132 = scmp.ne.s32.totalorder %s117, %s131
      %p133 = scmp.eq.s32.totalorder %s25, 0
      %p134 = por %p132, %p133
      %s136 = sadd.s32 %s135, 1
      %p139 = scmp.eq.s32.totalorder %s19, 1
      %p140 = scmp.ne.s32.totalorder %s135, %s137
      %p141 = scmp.eq.s32.totalorder %s19, 0
      %p142 = por %p140, %p141
      %p143 = scmp.ne.s32.totalorder %s135, %s137
      %p144 = scmp.eq.s32.totalorder %s24, 1
      %p145 = por %p143, %p144
      %p146 = scmp.ne.s32.totalorder %s137, %s138
      %p147 = scmp.eq.s32.totalorder %s24, 0
      %p148 = por %p146, %p147
      %p149 = scmp.ne.s32.totalorder %s137, %s138
      %p150 = scmp.eq.s32.totalorder %s25, 1
      %p151 = por %p149, %p150
      %p153 = scmp.ne.s32.totalorder %s138, %s152
      %p154 = scmp.eq.s32.totalorder %s25, 0
      %p155 = por %p153, %p154
      %s156 = ssub.s32 %s26, %s38
      %p157 = scmp.eq.s32.totalorder %s156, 0
      %s159 = sadd.s32 %s158, 1
      %s160 = scalar_select %p157, %s158, %s159
      %p163 = pneg %p157
      %p164 = scmp.eq.s32.totalorder %s19, 1
      %p165 = por %p163, %p164
      %p166 = scmp.ne.s32.totalorder %s158, %s161
      %p167 = scmp.eq.s32.totalorder %s19, 0
      %p168 = por %p166, %p167
      %p169 = scmp.ne.s32.totalorder %s158, %s161
      %p170 = scmp.eq.s32.totalorder %s24, 1
      %p171 = por %p169, %p170
      %p172 = scmp.ne.s32.totalorder %s161, %s162
      %p173 = scmp.eq.s32.totalorder %s24, 0
      %p174 = por %p172, %p173
      %p175 = scmp.ne.s32.totalorder %s161, %s162
      %p176 = scmp.eq.s32.totalorder %s25, 1
      %p177 = por %p175, %p176
      %p179 = scmp.ne.s32.totalorder %s162, %s178
      %p180 = scmp.eq.s32.totalorder %s25, 0
      %p181 = por %p179, %p180
      %p182 = scmp.le.s32.totalorder 1, %s19
      %p183 = scmp.lt.s32.totalorder %s19, 3
      %p184 = pnand %p182, %p183
      %p185 = pneg %p184
      // Predicated region
      $region9: #{tpu_custom_call.1} parent=5 // pred_check
        _
      $region10: #{tpu_custom_call.1} parent=5 // pred_check_branch
        %187 = sbr.rel (%p184) target = $region12
      $region11: #{tpu_custom_call.1} parent=5 // pred_region
        %s188 = ssub.s32 %s19, 1
        // Predicated region
        $region13: #{tpu_custom_call.1} parent=11 // pred_check
          %p189 = pneg %p85
        $region14: #{tpu_custom_call.1} parent=11 // pred_check_branch
          %191 = sbr.rel (%p189) target = $region16
        $region15: #{tpu_custom_call.1} parent=11 // pred_region
          %s192 = smul.u32 64, %s29
          %194 = vsyncadd [#allocation7], 0
          %s195 = smul.addr %s192, 2
          %s196 = smul.addr %s195, 4
          %s197 = scalar_lea.hbm %s1, %s196
          %s198 = sshll.u32 %s197, 4
          %s199 = int_to_ptr.hbm [resolvable:$true] %s198
          %s200 = sshll.u32 [#allocation6], 4
          %s201 = int_to_ptr.vmem [resolvable:$true] %s200
          %206 = dma.hbm_to_vmem [thread:$0]  %s199, 8192, %s201, [#allocation7], 128, 128, 8
        $region16: #{tpu_custom_call.1} parent=11 // pred_fallthru
          _
        // Predicated region
        $region17: #{tpu_custom_call.1} parent=11 // pred_check
          %p207 = pneg %p106
        $region18: #{tpu_custom_call.1} parent=11 // pred_check_branch
          %209 = sbr.rel (%p207) target = $region20
        $region19: #{tpu_custom_call.1} parent=11 // pred_region
          %211 = vsyncadd [#allocation7], 0
          %s213 = sshll.u32 %s2, 4
          %s214 = int_to_ptr.hbm [resolvable:$true] %s213
          %s215 = sshll.u32 [#allocation8], 4
          %s216 = int_to_ptr.vmem [resolvable:$true] %s215
          %218 = dma.hbm_to_vmem [thread:$0]  %s214, 32, %s216, [#allocation7]
        $region20: #{tpu_custom_call.1} parent=11 // pred_fallthru
          _
        // Predicated region
        $region21: #{tpu_custom_call.1} parent=11 // pred_check
          %p219 = pneg %p127
        $region22: #{tpu_custom_call.1} parent=11 // pred_check_branch
          %221 = sbr.rel (%p219) target = $region24
        $region23: #{tpu_custom_call.1} parent=11 // pred_region
          %223 = vsyncadd [#allocation10], 0
          %s224 = sshll.u32 %s3, 4
          %s225 = int_to_ptr.hbm [resolvable:$true] %s224
          %s226 = sshll.u32 [#allocation9], 4
          %s227 = int_to_ptr.vmem [resolvable:$true] %s226
          %232 = dma.hbm_to_vmem [thread:$0]  %s225, 2048, %s227, [#allocation10], 64, 64, 4
        $region24: #{tpu_custom_call.1} parent=11 // pred_fallthru
          _
        // Predicated region
        $region25: #{tpu_custom_call.1} parent=11 // pred_check
          %p233 = pneg %p148
        $region26: #{tpu_custom_call.1} parent=11 // pred_check_branch
          %235 = sbr.rel (%p233) target = $region28
        $region27: #{tpu_custom_call.1} parent=11 // pred_region
          _
        $region28: #{tpu_custom_call.1} parent=11 // pred_fallthru
          _
      $region12: #{tpu_custom_call.1} parent=5 // pred_fallthru
        _
      %p236 = scmp.lt.s32.totalorder %s19, 2
      // Predicated region
      $region29: #{tpu_custom_call.1} parent=5 // pred_check
        %p237 = pneg %p236
      $region30: #{tpu_custom_call.1} parent=5 // pred_check_branch
        %239 = sbr.rel (%p237) target = $region32
      $region31: #{tpu_custom_call.1} parent=5 // pred_region
        // Predicated region
        $region33: #{tpu_custom_call.1} parent=31 // pred_check
          %p240 = pneg %p53
        $region34: #{tpu_custom_call.1} parent=31 // pred_check_branch
          %242 = sbr.rel (%p240) target = $region36
        $region35: #{tpu_custom_call.1} parent=31 // pred_region
          %s243 = sand.u32 %s43, 1
          %s244 = scalar_lea.sflag [#allocation4], %s243
          %s245 = sand.u32 %s43, 1
          %s246 = smul.addr %s245, 64
          %s247 = scalar_lea.vmem [#allocation3], %s246
          %s248 = smul.u32 4, %s26
          %s249 = smul.u32 4, %s27
          %251 = vsyncadd %s244, 0
          %s252 = smul.addr %s248, 4
          %s253 = sadd.s32 %s249, %s252
          %s254 = smul.addr %s253, 4
          %s255 = scalar_lea.hbm %s0, %s254
          %s256 = sshll.u32 %s255, 4
          %s257 = int_to_ptr.hbm [resolvable:$true] %s256
          %s258 = sshll.u32 %s247, 4
          %s259 = int_to_ptr.vmem [resolvable:$true] %s258
          %264 = dma.hbm_to_vmem [thread:$0]  %s257, 1024, %s259, %s244, 256, 256, 16
        $region36: #{tpu_custom_call.1} parent=31 // pred_fallthru
          _
      $region32: #{tpu_custom_call.1} parent=5 // pred_fallthru
        _
      %p265 = scmp.le.s32.totalorder 1, %s19
      %p266 = scmp.lt.s32.totalorder %s19, 3
      %p267 = pnand %p265, %p266
      %p268 = pneg %p267
      // Predicated region
      $region37: #{tpu_custom_call.1} parent=5 // pred_check
        _
      $region38: #{tpu_custom_call.1} parent=5 // pred_check_branch
        %270 = sbr.rel (%p267) target = $region40
      $region39: #{tpu_custom_call.1} parent=5 // pred_region
        %s271 = ssub.s32 %s19, 1
        %s272 = sand.u32 %s46, 1
        %s273 = scalar_lea.sflag [#allocation4], %s272
        %s274 = sand.u32 %s46, 1
        %s275 = smul.addr %s274, 64
        %s276 = scalar_lea.vmem [#allocation3], %s275
        // Predicated region
        $region41: #{tpu_custom_call.1} parent=39 // pred_check
          %p277 = pneg %p59
        $region42: #{tpu_custom_call.1} parent=39 // pred_check_branch
          %279 = sbr.rel (%p277) target = $region44
        $region43: #{tpu_custom_call.1} parent=39 // pred_region
          %281 = dma.done %s273, 1024
        $region44: #{tpu_custom_call.1} parent=39 // pred_fallthru
          _
        // Predicated region
        $region45: #{tpu_custom_call.1} parent=39 // pred_check
          %p282 = pneg %p85
        $region46: #{tpu_custom_call.1} parent=39 // pred_check_branch
          %284 = sbr.rel (%p282) target = $region48
        $region47: #{tpu_custom_call.1} parent=39 // pred_region
          %286 = dma.done [#allocation7], 8192
        $region48: #{tpu_custom_call.1} parent=39 // pred_fallthru
          _
        // Predicated region
        $region49: #{tpu_custom_call.1} parent=39 // pred_check
          %p287 = pneg %p106
        $region50: #{tpu_custom_call.1} parent=39 // pred_check_branch
          %289 = sbr.rel (%p287) target = $region52
        $region51: #{tpu_custom_call.1} parent=39 // pred_region
          %291 = dma.done [#allocation7], 32
        $region52: #{tpu_custom_call.1} parent=39 // pred_fallthru
          _
        // Predicated region
        $region53: #{tpu_custom_call.1} parent=39 // pred_check
          %p292 = pneg %p127
        $region54: #{tpu_custom_call.1} parent=39 // pred_check_branch
          %294 = sbr.rel (%p292) target = $region56
        $region55: #{tpu_custom_call.1} parent=39 // pred_region
          %296 = dma.done [#allocation10], 2048
        $region56: #{tpu_custom_call.1} parent=39 // pred_fallthru
          _
        %s297 = sand.u32 %s46, 1
        %s298 = scalar_lea.sflag [#allocation4], %s297
        %s299 = sand.u32 %s46, 1
        %s300 = smul.addr %s299, 64
        %s301 = scalar_lea.vmem [#allocation3], %s300
        %p302 = pneg %p59
        %p303 = pneg %p56
        %p304 = pneg %p85
        %p305 = pneg %p82
        %p306 = pneg %p106
        %p307 = pneg %p103
        %p308 = pneg %p127
        %p309 = pneg %p124
        %p310 = pneg %p148
        %p311 = pneg %p145
        %p312 = pneg %p174
        %p313 = pneg %p171
        %s314 = sand.u32 %s161, 1
        %s315 = scalar_lea.sflag [#allocation5], %s314
        %s316 = sand.u32 %s161, 1
        %s317 = smul.addr %s316, 32
        %s318 = scalar_lea.vmem [#allocation11], %s317
        %s319 = smul.u32 4, %s28
        %s320 = smul.u32 4, %s29
        %s321 = smul.u32 64, %s29
        %s322 = smul.u32 4, %s28
        %p323 = scmp.eq.s32.totalorder %s29, 0
        // Predicated region
        $region57: #{tpu_custom_call.1} parent=39 // pred_check
          %p324 = pneg %p323
        $region58: #{tpu_custom_call.1} parent=39 // pred_check_branch
          %326 = sbr.rel (%p324) target = $region60
        $region59: #{tpu_custom_call.1} parent=39 // pred_region
          %327 = vst [vmem:[#allocation2] sm:$0xff] 0.0
          %328 = vst [vmem:[#allocation2 + $0x8] sm:$0xff] 0.0
          %329 = vst [vmem:[#allocation2 + $0x10] sm:$0xff] 0.0
          %330 = vst [vmem:[#allocation2 + $0x18] sm:$0xff] 0.0
          %331 = vst [vmem:[#allocation2 + $0x20] sm:$0xff] 0.0
          %332 = vst [vmem:[#allocation2 + $0x28] sm:$0xff] 0.0
          %333 = vst [vmem:[#allocation2 + $0x30] sm:$0xff] 0.0
          %334 = vst [vmem:[#allocation2 + $0x38] sm:$0xff] 0.0
        $region60: #{tpu_custom_call.1} parent=39 // pred_fallthru
          _
        %v335 = vld [vmem:[#allocation2] sm:$0xff]
        %v336 = vld [vmem:[#allocation2 + $0x8] sm:$0xff]
        %v337 = vld [vmem:[#allocation2 + $0x10] sm:$0xff]
        %v338 = vld [vmem:[#allocation2 + $0x18] sm:$0xff]
        %v339 = vld [vmem:[#allocation2 + $0x20] sm:$0xff]
        %v340 = vld [vmem:[#allocation2 + $0x28] sm:$0xff]
        %v341 = vld [vmem:[#allocation2 + $0x30] sm:$0xff]
        %v342 = vld [vmem:[#allocation2 + $0x38] sm:$0xff]
        %v343 = vld [vmem:[%s276] sm:$0xff]
        %v344 = vld [vmem:[%s276 + $0x8] sm:$0xff]
        %v345 = vld [vmem:[%s276 + $0x10] sm:$0xff]
        %v346 = vld [vmem:[%s276 + $0x18] sm:$0xff]
        %v347 = vld [vmem:[%s276 + $0x20] sm:$0xff]
        %v348 = vld [vmem:[%s276 + $0x28] sm:$0xff]
        %v349 = vld [vmem:[%s276 + $0x30] sm:$0xff]
        %v350 = vld [vmem:[%s276 + $0x38] sm:$0xff]
        %v351 = vld [vmem:[#allocation6] sm:$0xff]
        %v352 = vld [vmem:[#allocation6 + $0x8] sm:$0xff]
        %v353 = vld [vmem:[#allocation6 + $0x10] sm:$0xff]
        %v354 = vld [vmem:[#allocation6 + $0x18] sm:$0xff]
        %v355 = vld [vmem:[#allocation6 + $0x20] sm:$0xff]
        %v356 = vld [vmem:[#allocation6 + $0x28] sm:$0xff]
        %v357 = vld [vmem:[#allocation6 + $0x30] sm:$0xff]
        %v358 = vld [vmem:[#allocation6 + $0x38] sm:$0xff]
        %v359 = vld [vmem:[#allocation6 + $0x40] sm:$0xff]
        %v360 = vld [vmem:[#allocation6 + $0x48] sm:$0xff]
        %v361 = vld [vmem:[#allocation6 + $0x50] sm:$0xff]
        %v362 = vld [vmem:[#allocation6 + $0x58] sm:$0xff]
        %v363 = vld [vmem:[#allocation6 + $0x60] sm:$0xff]
        %v364 = vld [vmem:[#allocation6 + $0x68] sm:$0xff]
        %v365 = vld [vmem:[#allocation6 + $0x70] sm:$0xff]
        %v366 = vld [vmem:[#allocation6 + $0x78] sm:$0xff]
        %v367 = vld [vmem:[#allocation6 + $0x80] sm:$0xff]
        %v368 = vld [vmem:[#allocation6 + $0x88] sm:$0xff]
        %v369 = vld [vmem:[#allocation6 + $0x90] sm:$0xff]
        %v370 = vld [vmem:[#allocation6 + $0x98] sm:$0xff]
        %v371 = vld [vmem:[#allocation6 + $0xa0] sm:$0xff]
        %v372 = vld [vmem:[#allocation6 + $0xa8] sm:$0xff]
        %v373 = vld [vmem:[#allocation6 + $0xb0] sm:$0xff]
        %v374 = vld [vmem:[#allocation6 + $0xb8] sm:$0xff]
        %v375 = vld [vmem:[#allocation6 + $0xc0] sm:$0xff]
        %v376 = vld [vmem:[#allocation6 + $0xc8] sm:$0xff]
        %v377 = vld [vmem:[#allocation6 + $0xd0] sm:$0xff]
        %v378 = vld [vmem:[#allocation6 + $0xd8] sm:$0xff]
        %v379 = vld [vmem:[#allocation6 + $0xe0] sm:$0xff]
        %v380 = vld [vmem:[#allocation6 + $0xe8] sm:$0xff]
        %v381 = vld [vmem:[#allocation6 + $0xf0] sm:$0xff]
        %v382 = vld [vmem:[#allocation6 + $0xf8] sm:$0xff]
        %v383 = vld [vmem:[#allocation6 + $0x100] sm:$0xff]
        %v384 = vld [vmem:[#allocation6 + $0x108] sm:$0xff]
        %v385 = vld [vmem:[#allocation6 + $0x110] sm:$0xff]
        %v386 = vld [vmem:[#allocation6 + $0x118] sm:$0xff]
        %v387 = vld [vmem:[#allocation6 + $0x120] sm:$0xff]
        %v388 = vld [vmem:[#allocation6 + $0x128] sm:$0xff]
        %v389 = vld [vmem:[#allocation6 + $0x130] sm:$0xff]
        %v390 = vld [vmem:[#allocation6 + $0x138] sm:$0xff]
        %v391 = vld [vmem:[#allocation6 + $0x140] sm:$0xff]
        %v392 = vld [vmem:[#allocation6 + $0x148] sm:$0xff]
        %v393 = vld [vmem:[#allocation6 + $0x150] sm:$0xff]
        %v394 = vld [vmem:[#allocation6 + $0x158] sm:$0xff]
        %v395 = vld [vmem:[#allocation6 + $0x160] sm:$0xff]
        %v396 = vld [vmem:[#allocation6 + $0x168] sm:$0xff]
        %v397 = vld [vmem:[#allocation6 + $0x170] sm:$0xff]
        %v398 = vld [vmem:[#allocation6 + $0x178] sm:$0xff]
        %v399 = vld [vmem:[#allocation6 + $0x180] sm:$0xff]
        %v400 = vld [vmem:[#allocation6 + $0x188] sm:$0xff]
        %v401 = vld [vmem:[#allocation6 + $0x190] sm:$0xff]
        %v402 = vld [vmem:[#allocation6 + $0x198] sm:$0xff]
        %v403 = vld [vmem:[#allocation6 + $0x1a0] sm:$0xff]
        %v404 = vld [vmem:[#allocation6 + $0x1a8] sm:$0xff]
        %v405 = vld [vmem:[#allocation6 + $0x1b0] sm:$0xff]
        %v406 = vld [vmem:[#allocation6 + $0x1b8] sm:$0xff]
        %v407 = vld [vmem:[#allocation6 + $0x1c0] sm:$0xff]
        %v408 = vld [vmem:[#allocation6 + $0x1c8] sm:$0xff]
        %v409 = vld [vmem:[#allocation6 + $0x1d0] sm:$0xff]
        %v410 = vld [vmem:[#allocation6 + $0x1d8] sm:$0xff]
        %v411 = vld [vmem:[#allocation6 + $0x1e0] sm:$0xff]
        %v412 = vld [vmem:[#allocation6 + $0x1e8] sm:$0xff]
        %v413 = vld [vmem:[#allocation6 + $0x1f0] sm:$0xff]
        %v414 = vld [vmem:[#allocation6 + $0x1f8] sm:$0xff]
        %v423 = vunpack.c.l.b16 %v343
        %v424 = vunpack.c.h.b16 %v343
        %v425 = vunpack.c.l.b16 %v344
        %v426 = vunpack.c.h.b16 %v344
        %v427 = vunpack.c.l.b16 %v345
        %v428 = vunpack.c.h.b16 %v345
        %v429 = vunpack.c.l.b16 %v346
        %v430 = vunpack.c.h.b16 %v346
        %v431 = vunpack.c.l.b16 %v347
        %v432 = vunpack.c.h.b16 %v347
        %v433 = vunpack.c.l.b16 %v348
        %v434 = vunpack.c.h.b16 %v348
        %v435 = vunpack.c.l.b16 %v349
        %v436 = vunpack.c.h.b16 %v349
        %v437 = vunpack.c.l.b16 %v350
        %v438 = vunpack.c.h.b16 %v350
        %v439 = vpack.c.b16 %v427, %v423
        %v440 = vpack.c.b16 %v428, %v424
        %v441 = vpack.c.b16 %v429, %v425
        %v442 = vpack.c.b16 %v430, %v426
        %v443 = vpack.c.b16 %v435, %v431
        %v444 = vpack.c.b16 %v436, %v432
        %v445 = vpack.c.b16 %v437, %v433
        %v446 = vpack.c.b16 %v438, %v434
        %v519 = vunpack.c.l.b16 %v351
        %v520 = vunpack.c.h.b16 %v351
        %v521 = vunpack.c.l.b16 %v352
        %v522 = vunpack.c.h.b16 %v352
        %v523 = vunpack.c.l.b16 %v353
        %v524 = vunpack.c.h.b16 %v353
        %v525 = vunpack.c.l.b16 %v354
        %v526 = vunpack.c.h.b16 %v354
        %v527 = vunpack.c.l.b16 %v355
        %v528 = vunpack.c.h.b16 %v355
        %v529 = vunpack.c.l.b16 %v356
        %v530 = vunpack.c.h.b16 %v356
        %v531 = vunpack.c.l.b16 %v357
        %v532 = vunpack.c.h.b16 %v357
        %v533 = vunpack.c.l.b16 %v358
        %v534 = vunpack.c.h.b16 %v358
        %v535 = vunpack.c.l.b16 %v359
        %v536 = vunpack.c.h.b16 %v359
        %v537 = vunpack.c.l.b16 %v360
        %v538 = vunpack.c.h.b16 %v360
        %v539 = vunpack.c.l.b16 %v361
        %v540 = vunpack.c.h.b16 %v361
        %v541 = vunpack.c.l.b16 %v362
        %v542 = vunpack.c.h.b16 %v362
        %v543 = vunpack.c.l.b16 %v363
        %v544 = vunpack.c.h.b16 %v363
        %v545 = vunpack.c.l.b16 %v364
        %v546 = vunpack.c.h.b16 %v364
        %v547 = vunpack.c.l.b16 %v365
        %v548 = vunpack.c.h.b16 %v365
        %v549 = vunpack.c.l.b16 %v366
        %v550 = vunpack.c.h.b16 %v366
        %v551 = vunpack.c.l.b16 %v367
        %v552 = vunpack.c.h.b16 %v367
        %v553 = vunpack.c.l.b16 %v368
        %v554 = vunpack.c.h.b16 %v368
        %v555 = vunpack.c.l.b16 %v369
        %v556 = vunpack.c.h.b16 %v369
        %v557 = vunpack.c.l.b16 %v370
        %v558 = vunpack.c.h.b16 %v370
        %v559 = vunpack.c.l.b16 %v371
        %v560 = vunpack.c.h.b16 %v371
        %v561 = vunpack.c.l.b16 %v372
        %v562 = vunpack.c.h.b16 %v372
        %v563 = vunpack.c.l.b16 %v373
        %v564 = vunpack.c.h.b16 %v373
        %v565 = vunpack.c.l.b16 %v374
        %v566 = vunpack.c.h.b16 %v374
        %v567 = vunpack.c.l.b16 %v375
        %v568 = vunpack.c.h.b16 %v375
        %v569 = vunpack.c.l.b16 %v376
        %v570 = vunpack.c.h.b16 %v376
        %v571 = vunpack.c.l.b16 %v377
        %v572 = vunpack.c.h.b16 %v377
        %v573 = vunpack.c.l.b16 %v378
        %v574 = vunpack.c.h.b16 %v378
        %v575 = vunpack.c.l.b16 %v379
        %v576 = vunpack.c.h.b16 %v379
        %v577 = vunpack.c.l.b16 %v380
        %v578 = vunpack.c.h.b16 %v380
        %v579 = vunpack.c.l.b16 %v381
        %v580 = vunpack.c.h.b16 %v381
        %v581 = vunpack.c.l.b16 %v382
        %v582 = vunpack.c.h.b16 %v382
        %v583 = vunpack.c.l.b16 %v383
        %v584 = vunpack.c.h.b16 %v383
        %v585 = vunpack.c.l.b16 %v384
        %v586 = vunpack.c.h.b16 %v384
        %v587 = vunpack.c.l.b16 %v385
        %v588 = vunpack.c.h.b16 %v385
        %v589 = vunpack.c.l.b16 %v386
        %v590 = vunpack.c.h.b16 %v386
        %v591 = vunpack.c.l.b16 %v387
        %v592 = vunpack.c.h.b16 %v387
        %v593 = vunpack.c.l.b16 %v388
        %v594 = vunpack.c.h.b16 %v388
        %v595 = vunpack.c.l.b16 %v389
        %v596 = vunpack.c.h.b16 %v389
        %v597 = vunpack.c.l.b16 %v390
        %v598 = vunpack.c.h.b16 %v390
        %v599 = vunpack.c.l.b16 %v391
        %v600 = vunpack.c.h.b16 %v391
        %v601 = vunpack.c.l.b16 %v392
        %v602 = vunpack.c.h.b16 %v392
        %v603 = vunpack.c.l.b16 %v393
        %v604 = vunpack.c.h.b16 %v393
        %v605 = vunpack.c.l.b16 %v394
        %v606 = vunpack.c.h.b16 %v394
        %v607 = vunpack.c.l.b16 %v395
        %v608 = vunpack.c.h.b16 %v395
        %v609 = vunpack.c.l.b16 %v396
        %v610 = vunpack.c.h.b16 %v396
        %v611 = vunpack.c.l.b16 %v397
        %v612 = vunpack.c.h.b16 %v397
        %v613 = vunpack.c.l.b16 %v398
        %v614 = vunpack.c.h.b16 %v398
        %v615 = vunpack.c.l.b16 %v399
        %v616 = vunpack.c.h.b16 %v399
        %v617 = vunpack.c.l.b16 %v400
        %v618 = vunpack.c.h.b16 %v400
        %v619 = vunpack.c.l.b16 %v401
        %v620 = vunpack.c.h.b16 %v401
        %v621 = vunpack.c.l.b16 %v402
        %v622 = vunpack.c.h.b16 %v402
        %v623 = vunpack.c.l.b16 %v403
        %v624 = vunpack.c.h.b16 %v403
        %v625 = vunpack.c.l.b16 %v404
        %v626 = vunpack.c.h.b16 %v404
        %v627 = vunpack.c.l.b16 %v405
        %v628 = vunpack.c.h.b16 %v405
        %v629 = vunpack.c.l.b16 %v406
        %v630 = vunpack.c.h.b16 %v406
        %v631 = vunpack.c.l.b16 %v407
        %v632 = vunpack.c.h.b16 %v407
        %v633 = vunpack.c.l.b16 %v408
        %v634 = vunpack.c.h.b16 %v408
        %v635 = vunpack.c.l.b16 %v409
        %v636 = vunpack.c.h.b16 %v409
        %v637 = vunpack.c.l.b16 %v410
        %v638 = vunpack.c.h.b16 %v410
        %v639 = vunpack.c.l.b16 %v411
        %v640 = vunpack.c.h.b16 %v411
        %v641 = vunpack.c.l.b16 %v412
        %v642 = vunpack.c.h.b16 %v412
        %v643 = vunpack.c.l.b16 %v413
        %v644 = vunpack.c.h.b16 %v413
        %v645 = vunpack.c.l.b16 %v414
        %v646 = vunpack.c.h.b16 %v414
        %v647 = vpack.c.b16 %v521, %v519
        %v648 = vpack.c.b16 %v522, %v520
        %v649 = vpack.c.b16 %v525, %v523
        %v650 = vpack.c.b16 %v526, %v524
        %v651 = vpack.c.b16 %v529, %v527
        %v652 = vpack.c.b16 %v530, %v528
        %v653 = vpack.c.b16 %v533, %v531
        %v654 = vpack.c.b16 %v534, %v532
        %v655 = vpack.c.b16 %v537, %v535
        %v656 = vpack.c.b16 %v538, %v536
        %v657 = vpack.c.b16 %v541, %v539
        %v658 = vpack.c.b16 %v542, %v540
        %v659 = vpack.c.b16 %v545, %v543
        %v660 = vpack.c.b16 %v546, %v544
        %v661 = vpack.c.b16 %v549, %v547
        %v662 = vpack.c.b16 %v550, %v548
        %v663 = vpack.c.b16 %v553, %v551
        %v664 = vpack.c.b16 %v554, %v552
        %v665 = vpack.c.b16 %v557, %v555
        %v666 = vpack.c.b16 %v558, %v556
        %v667 = vpack.c.b16 %v561, %v559
        %v668 = vpack.c.b16 %v562, %v560
        %v669 = vpack.c.b16 %v565, %v563
        %v670 = vpack.c.b16 %v566, %v564
        %v671 = vpack.c.b16 %v569, %v567
        %v672 = vpack.c.b16 %v570, %v568
        %v673 = vpack.c.b16 %v573, %v571
        %v674 = vpack.c.b16 %v574, %v572
        %v675 = vpack.c.b16 %v577, %v575
        %v676 = vpack.c.b16 %v578, %v576
        %v677 = vpack.c.b16 %v581, %v579
        %v678 = vpack.c.b16 %v582, %v580
        %v679 = vpack.c.b16 %v585, %v583
        %v680 = vpack.c.b16 %v586, %v584
        %v681 = vpack.c.b16 %v589, %v587
        %v682 = vpack.c.b16 %v590, %v588
        %v683 = vpack.c.b16 %v593, %v591
        %v684 = vpack.c.b16 %v594, %v592
        %v685 = vpack.c.b16 %v597, %v595
        %v686 = vpack.c.b16 %v598, %v596
        %v687 = vpack.c.b16 %v601, %v599
        %v688 = vpack.c.b16 %v602, %v600
        %v689 = vpack.c.b16 %v605, %v603
        %v690 = vpack.c.b16 %v606, %v604
        %v691 = vpack.c.b16 %v609, %v607
        %v692 = vpack.c.b16 %v610, %v608
        %v693 = vpack.c.b16 %v613, %v611
        %v694 = vpack.c.b16 %v614, %v612
        %v695 = vpack.c.b16 %v617, %v615
        %v696 = vpack.c.b16 %v618, %v616
        %v697 = vpack.c.b16 %v621, %v619
        %v698 = vpack.c.b16 %v622, %v620
        %v699 = vpack.c.b16 %v625, %v623
        %v700 = vpack.c.b16 %v626, %v624
        %v701 = vpack.c.b16 %v629, %v627
        %v702 = vpack.c.b16 %v630, %v628
        %v703 = vpack.c.b16 %v633, %v631
        %v704 = vpack.c.b16 %v634, %v632
        %v705 = vpack.c.b16 %v637, %v635
        %v706 = vpack.c.b16 %v638, %v636
        %v707 = vpack.c.b16 %v641, %v639
        %v708 = vpack.c.b16 %v642, %v640
        %v709 = vpack.c.b16 %v645, %v643
        %v710 = vpack.c.b16 %v646, %v644
        %775 = vmatpush.bf16.msra.mxu0 %v661
        %776 = vmatpush.bf16.msra.mxu0 %v659
        %777 = vmatpush.bf16.msra.mxu0 %v657
        %778 = vmatpush.bf16.msra.mxu0 %v655
        %779 = vmatpush.bf16.msra.mxu0 %v653
        %780 = vmatpush.bf16.msra.mxu0 %v651
        %781 = vmatpush.bf16.msra.mxu0 %v649
        %782 = vmatpush.bf16.msra.mxu0 %v647
        %783 = vmatmul.bf16.gmra.mxu0 %v439
        %v784 = vpop.f32.mrf.mxu0
        %v785 = vadd.f32 0.0, %v784
        %v786 = vpop.f32.mrf.mxu0
        %v787 = vadd.f32 0.0, %v786
        %788 = vmatmul.bf16.gmra.mxu0 %v443
        %v789 = vpop.f32.mrf.mxu0
        %v790 = vadd.f32 0.0, %v789
        %v791 = vpop.f32.mrf.mxu0
        %v792 = vadd.f32 0.0, %v791
        %793 = vdwg.mxu0
        %794 = vmatpush.bf16.msra.mxu0 %v677
        %795 = vmatpush.bf16.msra.mxu0 %v675
        %796 = vmatpush.bf16.msra.mxu0 %v673
        %797 = vmatpush.bf16.msra.mxu0 %v671
        %798 = vmatpush.bf16.msra.mxu0 %v669
        %799 = vmatpush.bf16.msra.mxu0 %v667
        %800 = vmatpush.bf16.msra.mxu0 %v665
        %801 = vmatpush.bf16.msra.mxu0 %v663
        %802 = vmatmul.bf16.gmra.mxu0 %v440
        %v803 = vpop.f32.mrf.mxu0
        %v804 = vadd.f32 %v785, %v803
        %v805 = vpop.f32.mrf.mxu0
        %v806 = vadd.f32 %v787, %v805
        %807 = vmatmul.bf16.gmra.mxu0 %v444
        %v808 = vpop.f32.mrf.mxu0
        %v809 = vadd.f32 %v790, %v808
        %v810 = vpop.f32.mrf.mxu0
        %v811 = vadd.f32 %v792, %v810
        %812 = vdwg.mxu0
        %813 = vmatpush.bf16.msra.mxu0 %v693
        %814 = vmatpush.bf16.msra.mxu0 %v691
        %815 = vmatpush.bf16.msra.mxu0 %v689
        %816 = vmatpush.bf16.msra.mxu0 %v687
        %817 = vmatpush.bf16.msra.mxu0 %v685
        %818 = vmatpush.bf16.msra.mxu0 %v683
        %819 = vmatpush.bf16.msra.mxu0 %v681
        %820 = vmatpush.bf16.msra.mxu0 %v679
        %821 = vmatmul.bf16.gmra.mxu0 %v441
        %v822 = vpop.f32.mrf.mxu0
        %v823 = vadd.f32 %v804, %v822
        %v824 = vpop.f32.mrf.mxu0
        %v825 = vadd.f32 %v806, %v824
        %826 = vmatmul.bf16.gmra.mxu0 %v445
        %v827 = vpop.f32.mrf.mxu0
        %v828 = vadd.f32 %v809, %v827
        %v829 = vpop.f32.mrf.mxu0
        %v830 = vadd.f32 %v811, %v829
        %831 = vdwg.mxu0
        %832 = vmatpush.bf16.msra.mxu0 %v709
        %833 = vmatpush.bf16.msra.mxu0 %v707
        %834 = vmatpush.bf16.msra.mxu0 %v705
        %835 = vmatpush.bf16.msra.mxu0 %v703
        %836 = vmatpush.bf16.msra.mxu0 %v701
        %837 = vmatpush.bf16.msra.mxu0 %v699
        %838 = vmatpush.bf16.msra.mxu0 %v697
        %839 = vmatpush.bf16.msra.mxu0 %v695
        %840 = vmatmul.bf16.gmra.mxu0 %v442
        %v841 = vpop.f32.mrf.mxu0
        %v842 = vadd.f32 %v823, %v841
        %v843 = vpop.f32.mrf.mxu0
        %v844 = vadd.f32 %v825, %v843
        %845 = vmatmul.bf16.gmra.mxu0 %v446
        %v846 = vpop.f32.mrf.mxu0
        %v847 = vadd.f32 %v828, %v846
        %v848 = vpop.f32.mrf.mxu0
        %v849 = vadd.f32 %v830, %v848
        %850 = vdwg.mxu0
        %851 = vmatpush.bf16.msra.mxu0 %v662
        %852 = vmatpush.bf16.msra.mxu0 %v660
        %853 = vmatpush.bf16.msra.mxu0 %v658
        %854 = vmatpush.bf16.msra.mxu0 %v656
        %855 = vmatpush.bf16.msra.mxu0 %v654
        %856 = vmatpush.bf16.msra.mxu0 %v652
        %857 = vmatpush.bf16.msra.mxu0 %v650
        %858 = vmatpush.bf16.msra.mxu0 %v648
        %859 = vmatmul.bf16.gmra.mxu0 %v439
        %v860 = vpop.f32.mrf.mxu0
        %v861 = vadd.f32 0.0, %v860
        %v862 = vpop.f32.mrf.mxu0
        %v863 = vadd.f32 0.0, %v862
        %864 = vmatmul.bf16.gmra.mxu0 %v443
        %v865 = vpop.f32.mrf.mxu0
        %v866 = vadd.f32 0.0, %v865
        %v867 = vpop.f32.mrf.mxu0
        %v868 = vadd.f32 0.0, %v867
        %869 = vdwg.mxu0
        %870 = vmatpush.bf16.msra.mxu0 %v678
        %871 = vmatpush.bf16.msra.mxu0 %v676
        %872 = vmatpush.bf16.msra.mxu0 %v674
        %873 = vmatpush.bf16.msra.mxu0 %v672
        %874 = vmatpush.bf16.msra.mxu0 %v670
        %875 = vmatpush.bf16.msra.mxu0 %v668
        %876 = vmatpush.bf16.msra.mxu0 %v666
        %877 = vmatpush.bf16.msra.mxu0 %v664
        %878 = vmatmul.bf16.gmra.mxu0 %v440
        %v879 = vpop.f32.mrf.mxu0
        %v880 = vadd.f32 %v861, %v879
        %v881 = vpop.f32.mrf.mxu0
        %v882 = vadd.f32 %v863, %v881
        %883 = vmatmul.bf16.gmra.mxu0 %v444
        %v884 = vpop.f32.mrf.mxu0
        %v885 = vadd.f32 %v866, %v884
        %v886 = vpop.f32.mrf.mxu0
        %v887 = vadd.f32 %v868, %v886
        %888 = vdwg.mxu0
        %889 = vmatpush.bf16.msra.mxu0 %v694
        %890 = vmatpush.bf16.msra.mxu0 %v692
        %891 = vmatpush.bf16.msra.mxu0 %v690
        %892 = vmatpush.bf16.msra.mxu0 %v688
        %893 = vmatpush.bf16.msra.mxu0 %v686
        %894 = vmatpush.bf16.msra.mxu0 %v684
        %895 = vmatpush.bf16.msra.mxu0 %v682
        %896 = vmatpush.bf16.msra.mxu0 %v680
        %897 = vmatmul.bf16.gmra.mxu0 %v441
        %v898 = vpop.f32.mrf.mxu0
        %v899 = vadd.f32 %v880, %v898
        %v900 = vpop.f32.mrf.mxu0
        %v901 = vadd.f32 %v882, %v900
        %902 = vmatmul.bf16.gmra.mxu0 %v445
        %v903 = vpop.f32.mrf.mxu0
        %v904 = vadd.f32 %v885, %v903
        %v905 = vpop.f32.mrf.mxu0
        %v906 = vadd.f32 %v887, %v905
        %907 = vdwg.mxu0
        %908 = vmatpush.bf16.msra.mxu0 %v710
        %909 = vmatpush.bf16.msra.mxu0 %v708
        %910 = vmatpush.bf16.msra.mxu0 %v706
        %911 = vmatpush.bf16.msra.mxu0 %v704
        %912 = vmatpush.bf16.msra.mxu0 %v702
        %913 = vmatpush.bf16.msra.mxu0 %v700
        %914 = vmatpush.bf16.msra.mxu0 %v698
        %915 = vmatpush.bf16.msra.mxu0 %v696
        %916 = vmatmul.bf16.gmra.mxu0 %v442
        %v917 = vpop.f32.mrf.mxu0
        %v918 = vadd.f32 %v899, %v917
        %v919 = vpop.f32.mrf.mxu0
        %v920 = vadd.f32 %v901, %v919
        %921 = vmatmul.bf16.gmra.mxu0 %v446
        %v922 = vpop.f32.mrf.mxu0
        %v923 = vadd.f32 %v904, %v922
        %v924 = vpop.f32.mrf.mxu0
        %v925 = vadd.f32 %v906, %v924
        %926 = vdwg.mxu0
        %v927 = vadd.f32 %v335, %v842
        %v928 = vadd.f32 %v336, %v918
        %v929 = vadd.f32 %v337, %v844
        %v930 = vadd.f32 %v338, %v920
        %v931 = vadd.f32 %v339, %v847
        %v932 = vadd.f32 %v340, %v923
        %v933 = vadd.f32 %v341, %v849
        %v934 = vadd.f32 %v342, %v925
        %935 = vst [vmem:[#allocation2] sm:$0xff] %v927
        %936 = vst [vmem:[#allocation2 + $0x8] sm:$0xff] %v928
        %937 = vst [vmem:[#allocation2 + $0x10] sm:$0xff] %v929
        %938 = vst [vmem:[#allocation2 + $0x18] sm:$0xff] %v930
        %939 = vst [vmem:[#allocation2 + $0x20] sm:$0xff] %v931
        %940 = vst [vmem:[#allocation2 + $0x28] sm:$0xff] %v932
        %941 = vst [vmem:[#allocation2 + $0x30] sm:$0xff] %v933
        %942 = vst [vmem:[#allocation2 + $0x38] sm:$0xff] %v934
        // Predicated region
        $region61: #{tpu_custom_call.1} parent=39 // pred_check
          %p943 = pneg %p323
        $region62: #{tpu_custom_call.1} parent=39 // pred_check_branch
          %945 = sbr.rel (%p943) target = $region64
        $region63: #{tpu_custom_call.1} parent=39 // pred_region
          %v946 = vld [vmem:[#allocation2] sm:$0xff]
          %v947 = vld [vmem:[#allocation2 + $0x8] sm:$0xff]
          %v948 = vld [vmem:[#allocation2 + $0x10] sm:$0xff]
          %v949 = vld [vmem:[#allocation2 + $0x18] sm:$0xff]
          %v950 = vld [vmem:[#allocation2 + $0x20] sm:$0xff]
          %v951 = vld [vmem:[#allocation2 + $0x28] sm:$0xff]
          %v952 = vld [vmem:[#allocation2 + $0x30] sm:$0xff]
          %v953 = vld [vmem:[#allocation2 + $0x38] sm:$0xff]
          %v954 = vld [vmem:[#allocation8] sm:$0x3]
          %v956 = vperm.slane %v954, 0
          %v957 = vperm.slane %v954, 1
          %v960 = vadd.f32 %v946, %v956
          %v961 = vadd.f32 %v947, %v957
          %v962 = vadd.f32 %v948, %v956
          %v963 = vadd.f32 %v949, %v957
          %v964 = vadd.f32 %v950, %v956
          %v965 = vadd.f32 %v951, %v957
          %v966 = vadd.f32 %v952, %v956
          %v967 = vadd.f32 %v953, %v957
          %v968 = vmax.f32 %v960, 0.0
          %v969 = vmax.f32 %v961, 0.0
          %v970 = vmax.f32 %v962, 0.0
          %v971 = vmax.f32 %v963, 0.0
          %v972 = vmax.f32 %v964, 0.0
          %v973 = vmax.f32 %v965, 0.0
          %v974 = vmax.f32 %v966, 0.0
          %v975 = vmax.f32 %v967, 0.0
          %v976 = vpack.c.bf16 %v970, %v968
          %v977 = vpack.c.bf16 %v971, %v969
          %v978 = vpack.c.bf16 %v974, %v972
          %v979 = vpack.c.bf16 %v975, %v973
          %v980 = vld [vmem:[#allocation9] sm:$0xf]
          %v981 = vld [vmem:[#allocation9 + $0x4] sm:$0xf]
          %v982 = vld [vmem:[#allocation9 + $0x8] sm:$0xf]
          %v983 = vld [vmem:[#allocation9 + $0xc] sm:$0xf]
          %v984 = vld [vmem:[#allocation9 + $0x10] sm:$0xf]
          %v985 = vld [vmem:[#allocation9 + $0x14] sm:$0xf]
          %v986 = vld [vmem:[#allocation9 + $0x18] sm:$0xf]
          %v987 = vld [vmem:[#allocation9 + $0x1c] sm:$0xf]
          %v988 = vld [vmem:[#allocation9 + $0x20] sm:$0xf]
          %v989 = vld [vmem:[#allocation9 + $0x24] sm:$0xf]
          %v990 = vld [vmem:[#allocation9 + $0x28] sm:$0xf]
          %v991 = vld [vmem:[#allocation9 + $0x2c] sm:$0xf]
          %v992 = vld [vmem:[#allocation9 + $0x30] sm:$0xf]
          %v993 = vld [vmem:[#allocation9 + $0x34] sm:$0xf]
          %v994 = vld [vmem:[#allocation9 + $0x38] sm:$0xf]
          %v995 = vld [vmem:[#allocation9 + $0x3c] sm:$0xf]
          %v996 = vld [vmem:[#allocation9 + $0x40] sm:$0xf]
          %v997 = vld [vmem:[#allocation9 + $0x44] sm:$0xf]
          %v998 = vld [vmem:[#allocation9 + $0x48] sm:$0xf]
          %v999 = vld [vmem:[#allocation9 + $0x4c] sm:$0xf]
          %v1000 = vld [vmem:[#allocation9 + $0x50] sm:$0xf]
          %v1001 = vld [vmem:[#allocation9 + $0x54] sm:$0xf]
          %v1002 = vld [vmem:[#allocation9 + $0x58] sm:$0xf]
          %v1003 = vld [vmem:[#allocation9 + $0x5c] sm:$0xf]
          %v1004 = vld [vmem:[#allocation9 + $0x60] sm:$0xf]
          %v1005 = vld [vmem:[#allocation9 + $0x64] sm:$0xf]
          %v1006 = vld [vmem:[#allocation9 + $0x68] sm:$0xf]
          %v1007 = vld [vmem:[#allocation9 + $0x6c] sm:$0xf]
          %v1008 = vld [vmem:[#allocation9 + $0x70] sm:$0xf]
          %v1009 = vld [vmem:[#allocation9 + $0x74] sm:$0xf]
          %v1010 = vld [vmem:[#allocation9 + $0x78] sm:$0xf]
          %v1011 = vld [vmem:[#allocation9 + $0x7c] sm:$0xf]
          %v1012 = vld [vmem:[%s4] sm:$0x1]
          %v1014 = vperm.slane %v1012, 0
          %v1048 = vunpack.c.l.b16 %v980
          %v1049 = vunpack.c.l.b16 %v981
          %v1050 = vunpack.c.l.b16 %v982
          %v1051 = vunpack.c.l.b16 %v983
          %v1052 = vunpack.c.l.b16 %v984
          %v1053 = vunpack.c.l.b16 %v985
          %v1054 = vunpack.c.l.b16 %v986
          %v1055 = vunpack.c.l.b16 %v987
          %v1056 = vunpack.c.l.b16 %v988
          %v1057 = vunpack.c.l.b16 %v989
          %v1058 = vunpack.c.l.b16 %v990
          %v1059 = vunpack.c.l.b16 %v991
          %v1060 = vunpack.c.l.b16 %v992
          %v1061 = vunpack.c.l.b16 %v993
          %v1062 = vunpack.c.l.b16 %v994
          %v1063 = vunpack.c.l.b16 %v995
          %v1064 = vunpack.c.l.b16 %v996
          %v1065 = vunpack.c.l.b16 %v997
          %v1066 = vunpack.c.l.b16 %v998
          %v1067 = vunpack.c.l.b16 %v999
          %v1068 = vunpack.c.l.b16 %v1000
          %v1069 = vunpack.c.l.b16 %v1001
          %v1070 = vunpack.c.l.b16 %v1002
          %v1071 = vunpack.c.l.b16 %v1003
          %v1072 = vunpack.c.l.b16 %v1004
          %v1073 = vunpack.c.l.b16 %v1005
          %v1074 = vunpack.c.l.b16 %v1006
          %v1075 = vunpack.c.l.b16 %v1007
          %v1076 = vunpack.c.l.b16 %v1008
          %v1077 = vunpack.c.l.b16 %v1009
          %v1078 = vunpack.c.l.b16 %v1010
          %v1079 = vunpack.c.l.b16 %v1011
          %v1080 = vpack.c.b16 %v1049, %v1048
          %v1081 = vpack.c.b16 %v1051, %v1050
          %v1082 = vpack.c.b16 %v1053, %v1052
          %v1083 = vpack.c.b16 %v1055, %v1054
          %v1084 = vpack.c.b16 %v1057, %v1056
          %v1085 = vpack.c.b16 %v1059, %v1058
          %v1086 = vpack.c.b16 %v1061, %v1060
          %v1087 = vpack.c.b16 %v1063, %v1062
          %v1088 = vpack.c.b16 %v1065, %v1064
          %v1089 = vpack.c.b16 %v1067, %v1066
          %v1090 = vpack.c.b16 %v1069, %v1068
          %v1091 = vpack.c.b16 %v1071, %v1070
          %v1092 = vpack.c.b16 %v1073, %v1072
          %v1093 = vpack.c.b16 %v1075, %v1074
          %v1094 = vpack.c.b16 %v1077, %v1076
          %v1095 = vpack.c.b16 %v1079, %v1078
          %1112 = vmatpush.bf16.msra.mxu0 %v1087
          %1113 = vmatpush.bf16.msra.mxu0 %v1086
          %1114 = vmatpush.bf16.msra.mxu0 %v1085
          %1115 = vmatpush.bf16.msra.mxu0 %v1084
          %1116 = vmatpush.bf16.msra.mxu0 %v1083
          %1117 = vmatpush.bf16.msra.mxu0 %v1082
          %1118 = vmatpush.bf16.msra.mxu0 %v1081
          %1119 = vmatpush.bf16.msra.mxu0 %v1080
          %1120 = vmatmul.bf16.gmra.mxu0 %v976
          %v1121 = vpop.f32.mrf.mxu0
          %v1122 = vadd.f32 %v1014, %v1121
          %v1123 = vpop.f32.mrf.mxu0
          %v1124 = vadd.f32 %v1014, %v1123
          %1125 = vmatmul.bf16.gmra.mxu0 %v978
          %v1126 = vpop.f32.mrf.mxu0
          %v1127 = vadd.f32 %v1014, %v1126
          %v1128 = vpop.f32.mrf.mxu0
          %v1129 = vadd.f32 %v1014, %v1128
          %1130 = vdwg.mxu0
          %1131 = vmatpush.bf16.msra.mxu0 %v1095
          %1132 = vmatpush.bf16.msra.mxu0 %v1094
          %1133 = vmatpush.bf16.msra.mxu0 %v1093
          %1134 = vmatpush.bf16.msra.mxu0 %v1092
          %1135 = vmatpush.bf16.msra.mxu0 %v1091
          %1136 = vmatpush.bf16.msra.mxu0 %v1090
          %1137 = vmatpush.bf16.msra.mxu0 %v1089
          %1138 = vmatpush.bf16.msra.mxu0 %v1088
          %1139 = vmatmul.bf16.gmra.mxu0 %v977
          %v1140 = vpop.f32.mrf.mxu0
          %v1141 = vadd.f32 %v1122, %v1140
          %v1142 = vpop.f32.mrf.mxu0
          %v1143 = vadd.f32 %v1124, %v1142
          %1144 = vmatmul.bf16.gmra.mxu0 %v979
          %v1145 = vpop.f32.mrf.mxu0
          %v1146 = vadd.f32 %v1127, %v1145
          %v1147 = vpop.f32.mrf.mxu0
          %v1148 = vadd.f32 %v1129, %v1147
          %1149 = vdwg.mxu0
          %v1150 = vmax.f32 %v1141, 0.0
          %v1151 = vmax.f32 %v1143, 0.0
          %v1152 = vmax.f32 %v1146, 0.0
          %v1153 = vmax.f32 %v1148, 0.0
          %1154 = vst [vmem:[%s318] sm:$0xff] %v1150
          %1155 = vst [vmem:[%s318 + $0x8] sm:$0xff] %v1151
          %1156 = vst [vmem:[%s318 + $0x10] sm:$0xff] %v1152
          %1157 = vst [vmem:[%s318 + $0x18] sm:$0xff] %v1153
        $region64: #{tpu_custom_call.1} parent=39 // pred_fallthru
          _
        %s1158 = sand.u32 %s161, 1
        %s1159 = scalar_lea.sflag [#allocation5], %s1158
        %s1160 = sand.u32 %s161, 1
        %s1161 = smul.addr %s1160, 32
        %s1162 = scalar_lea.vmem [#allocation11], %s1161
        // Predicated region
        $region65: #{tpu_custom_call.1} parent=39 // pred_check
          %p1163 = pneg %p171
        $region66: #{tpu_custom_call.1} parent=39 // pred_check_branch
          %1165 = sbr.rel (%p1163) target = $region68
        $region67: #{tpu_custom_call.1} parent=39 // pred_region
          %s1166 = smul.u32 4, %s28
          %1168 = vsyncadd %s1159, 0
          %s1169 = smul.addr %s1166, 8
          %s1170 = scalar_lea.hbm %s5, %s1169
          %s1171 = sshll.u32 %s1162, 4
          %s1172 = int_to_ptr.vmem [resolvable:$true] %s1171
          %s1173 = sshll.u32 %s1170, 4
          %s1174 = int_to_ptr.hbm [resolvable:$true] %s1173
          %1179 = dma.vmem_to_hbm [thread:$0]  %s1172, 512, %s1174, %s1159, 128, 128, 8
        $region68: #{tpu_custom_call.1} parent=39 // pred_fallthru
          _
      $region40: #{tpu_custom_call.1} parent=5 // pred_fallthru
        _
      %p1180 = scmp.le.s32.totalorder 2, %s19
      // Predicated region
      $region69: #{tpu_custom_call.1} parent=5 // pred_check
        %p1181 = pneg %p1180
      $region70: #{tpu_custom_call.1} parent=5 // pred_check_branch
        %1183 = sbr.rel (%p1181) target = $region72
      $region71: #{tpu_custom_call.1} parent=5 // pred_region
        %s1184 = ssub.s32 %s19, 2
        // Predicated region
        $region73: #{tpu_custom_call.1} parent=71 // pred_check
          %p1185 = pneg %p177
        $region74: #{tpu_custom_call.1} parent=71 // pred_check_branch
          %1187 = sbr.rel (%p1185) target = $region76
        $region75: #{tpu_custom_call.1} parent=71 // pred_region
          %s1188 = sand.u32 %s162, 1
          %s1189 = scalar_lea.sflag [#allocation5], %s1188
          %s1190 = sand.u32 %s162, 1
          %s1191 = smul.addr %s1190, 32
          %s1192 = scalar_lea.vmem [#allocation11], %s1191
          %1194 = dma.done %s1189, 512
        $region76: #{tpu_custom_call.1} parent=71 // pred_fallthru
          _
      $region72: #{tpu_custom_call.1} parent=5 // pred_fallthru
        _
    $region6: #{tpu_custom_call.1} parent=1 // loop_footer
      %s23 = sadd.s32 1, %s19
    $region7: #{tpu_custom_call.1} parent=1 // loop_footer_branch
      %18 = sbr.rel target = $region3
    $region8: #{tpu_custom_call.1} parent=1 // loop_exit
      _
    %1195 = vsyncpa [#allocation4], 1
    %s1196 = scalar_lea.sflag [#allocation4], 1
    %1197 = vsyncpa %s1196, 1
    %1198 = vsyncpa [#allocation7], 1
    %1199 = vsyncpa [#allocation10], 1
    %1200 = vsyncpa [#allocation5], 1
    %s1201 = scalar_lea.sflag [#allocation5], 1
    %1202 = vsyncpa %s1201, 1

</llo_original>
